<compile_context>
chip_gen: v7x
topology: tpu7x:2x2x1
jax: 0.10.0
libtpu: 0.0.40
codegen_flags: <defaults>
</compile_context>

<pallas_src>
import functools

import jax
import jax.numpy as jnp
from jax.experimental import pallas as pl
from jax.experimental.pallas import tpu as pltpu


def _round_up(x: int, m: int) -> int:
    return ((x + m - 1) // m) * m


def _cdiv(a: int, b: int) -> int:
    return (a + b - 1) // b


def _vmem_capacity_bytes() -> int:
    """Per-TensorCore VMEM capacity; conservative (v7x) fallback if unqueryable."""
    try:
        return int(pltpu.get_tpu_info().vmem_capacity_bytes)
    except Exception:
        return 64 << 20  # v7x has 64 MiB / TensorCore — the smallest of the targets


def _linear_kernel(x_ref, wt_ref, b_ref, o_ref):
    # MXU matmul with f32 accumulation + broadcast bias add on the VPU.
    acc = jnp.dot(x_ref[...], wt_ref[...], preferred_element_type=jnp.float32)
    o_ref[...] = (acc + b_ref[...]).astype(o_ref.dtype)


@functools.partial(jax.jit, static_argnames=("tile_n", "use_bf16"))
def logistic_regression_forward(x, weight, bias, *, tile_n=1024, use_bf16=True):
    """x: (N, D); weight: (C, D); bias: (C,). Returns (N, C) logits in x.dtype."""
    n, d = x.shape
    c = weight.shape[0]
    out_dtype = x.dtype

    # bf16 streaming (default) halves HBM bytes on the dominant x stream; the MXU
    # accumulates f32 either way, and bias add / output remain f32.
    in_dtype = jnp.bfloat16 if use_bf16 else x.dtype
    in_bytes = jnp.dtype(in_dtype).itemsize
    out_bytes = jnp.dtype(out_dtype).itemsize

    # ------------------------------------------------------------------ tile plan
    vmem_cap = _vmem_capacity_bytes()
    # ~40 MiB budget on 64 MiB/TC parts (v7x), ~80 MiB (capped at 96) on 128 MiB parts.
    budget = max(8 << 20, min((vmem_cap * 5) // 8, 96 << 20))

    d_lanes = _round_up(d, 128)          # VMEM lane padding of the streamed x tile
    c_lanes = _round_up(c, 128)          # VMEM lane padding of W.T / output tiles

    # Resident (grid-invariant) buffers: W.T and bias.
    w_vmem = _round_up(d, 8) * c_lanes * in_bytes
    b_vmem = 8 * 128 * 4
    single_buffer_w = w_vmem >= (1 << 20)   # only worth single-buffering when large
    resident_bytes = (1 if single_buffer_w else 2) * w_vmem + 2 * b_vmem

    # Deeper x pipeline when per-tile compute is tiny (DMA-latency bound regime).
    small_weight = d * c <= 128 * 128
    depth_x = 3 if small_weight else 2

    # Keep >= 2 grid steps so the "parallel" row axis can shard across v7x's 2 TCs.
    t = min(tile_n, max(8, _round_up(_cdiv(n, 2), 8)))

    # Clamp tile_n so the pipelined plan fits the generation-aware VMEM budget.
    per_row_bytes = depth_x * d_lanes * in_bytes + 2 * c_lanes * out_bytes
    avail = max(budget - resident_bytes - (2 << 20), 8 * per_row_bytes)
    t_fit = max(8, (avail // per_row_bytes) // 8 * 8)
    t = max(8, min(t, t_fit))

    grid_steps = _cdiv(n, t)             # ragged last tile handled by Pallas masking
    use_deep_pipeline = small_weight and grid_steps >= 4

    plan_bytes = resident_bytes + t * per_row_bytes
    vmem_limit = int(min(budget, max(2 * plan_bytes, 8 << 20)))

    # ------------------------------------------------------------------ operands
    # Cheap layout prep; `allow_input_fusion` lets XLA fuse these producers into the
    # pallas_call operands instead of materializing an extra HBM copy of x.
    x_in = x.astype(in_dtype)                         # (N, D)
    wt = weight.T.astype(in_dtype)                    # (D, C) resident
    b2 = bias.reshape(1, c).astype(jnp.float32)       # (1, C) resident

    # ------------------------------------------------------------------ specs
    x_kwargs = {"pipeline_mode": pl.Buffered(3)} if use_deep_pipeline else {}
    x_spec = pl.BlockSpec((t, d), lambda i: (i, 0), **x_kwargs)

    res_kwargs = {"pipeline_mode": pl.Buffered(1)} if single_buffer_w else {}
    wt_spec = pl.BlockSpec((d, c), lambda i: (0, 0), **res_kwargs)
    b_spec = pl.BlockSpec((1, c), lambda i: (0, 0), **res_kwargs)

    out_spec = pl.BlockSpec((t, c), lambda i: (i, 0))

    cost = pl.CostEstimate(
        flops=2 * n * d * c,
        transcendentals=0,
        bytes_accessed=(n * d * in_bytes + d * c * in_bytes + c * 4
                        + n * c * out_bytes),
    )

    return pl.pallas_call(
        _linear_kernel,
        out_shape=jax.ShapeDtypeStruct((n, c), out_dtype),
        grid_spec=pl.GridSpec(
            grid=(grid_steps,),
            in_specs=[x_spec, wt_spec, b_spec],
            out_specs=out_spec,
        ),
        compiler_params=pltpu.CompilerParams(
            dimension_semantics=("parallel",),
            vmem_limit_bytes=vmem_limit,
            allow_input_fusion=[True, True, True],
        ),
        cost_estimate=cost,
    )(x_in, wt, b2)


if __name__ == "__main__":
    # Small shapes consistent with the module: num_dim=32 features, num_class=8.
    N, NUM_DIM, NUM_CLASS = 16, 32, 8

    key = jax.random.PRNGKey(0)
    kx, kw, kb = jax.random.split(key, 3)

    x = jax.random.normal(kx, (N, NUM_DIM), dtype=jnp.float32)
    # Deterministic synthetic parameters (mimic nn.Linear's uniform(-1/sqrt(D), 1/sqrt(D))).
    bound = 1.0 / float(NUM_DIM) ** 0.5
    weight = jax.random.uniform(kw, (NUM_CLASS, NUM_DIM), jnp.float32, -bound, bound)
    bias = jax.random.uniform(kb, (NUM_CLASS,), jnp.float32, -bound, bound)

    # f32 path: matches the PyTorch reference tightly.
    logits_f32 = logistic_regression_forward(x, weight, bias, use_bf16=False)
    jax.block_until_ready(logits_f32)
    ref = x @ weight.T + bias
    assert logits_f32.shape == (N, NUM_CLASS)
    assert jnp.allclose(logits_f32, ref, atol=1e-5, rtol=1e-5)

    # Default (bf16-streamed) evaluation path: compare against a bf16-rounded reference.
    logits_bf = logistic_regression_forward(x, weight, bias)
    jax.block_until_ready(logits_bf)
    x_bf = x.astype(jnp.bfloat16).astype(jnp.float32)
    w_bf = weight.astype(jnp.bfloat16).astype(jnp.float32)
    ref_bf = x_bf @ w_bf.T + bias
    assert logits_bf.shape == (N, NUM_CLASS)
    assert jnp.allclose(logits_bf, ref_bf, atol=1e-3, rtol=1e-3)

    print("KERNEL_OK")
</pallas_src>

<mosaic_0001>
module attributes {stable_mosaic.version = 11 : i64} {
  func.func @_linear_kernel(%arg0: i32, %arg1: memref<8x32xf32, #tpu.memory_space<vmem>>, %arg2: memref<32x8xf32, #tpu.memory_space<vmem>>, %arg3: memref<1x8xf32, #tpu.memory_space<vmem>>, %arg4: memref<8x8xf32, #tpu.memory_space<vmem>>) attributes {dimension_semantics = [#tpu.dimension_semantics<parallel>], iteration_bounds = array<i64: 2>, scalar_prefetch = 0 : i64, scratch_operands = 0 : i64, tpu.core_type = #tpu.core_type<tc>, window_params = [{transform_indices = @transform_0, window_bounds = array<i64: 8, 32>}, {pipeline_mode = #tpu.pipeline_mode<synchronous>, transform_indices = @transform_1, window_bounds = array<i64: 32, 8>}, {pipeline_mode = #tpu.pipeline_mode<synchronous>, transform_indices = @transform_2, window_bounds = array<i64: 1, 8>}, {transform_indices = @transform_3, window_bounds = array<i64: 8, 8>}]} {
    %c0 = arith.constant 0 : index
    %c0_0 = arith.constant 0 : index
    %0 = vector.load %arg1[%c0, %c0_0] : memref<8x32xf32, #tpu.memory_space<vmem>>, vector<8x32xf32>
    %c0_1 = arith.constant 0 : index
    %c0_2 = arith.constant 0 : index
    %1 = vector.load %arg2[%c0_1, %c0_2] : memref<32x8xf32, #tpu.memory_space<vmem>>, vector<32x8xf32>
    %cst = arith.constant dense<0.000000e+00> : vector<8x8xf32>
    %2 = tpu.matmul %0, %1, %cst {dimension_numbers = #tpu.dot_dimension_numbers<[1], [0], [0], [1], [0, 0, 1, 1], [], []>} : vector<8x32xf32>, vector<32x8xf32>, vector<8x8xf32> -> vector<8x8xf32>
    %c0_3 = arith.constant 0 : index
    %c0_4 = arith.constant 0 : index
    %3 = vector.load %arg3[%c0_3, %c0_4] : memref<1x8xf32, #tpu.memory_space<vmem>>, vector<1x8xf32>
    %4 = vector.broadcast %3 : vector<1x8xf32> to vector<8x8xf32>
    %5 = arith.addf %2, %4 : vector<8x8xf32>
    %c0_5 = arith.constant 0 : index
    %c0_6 = arith.constant 0 : index
    %6 = vector.load %arg4[%c0_5, %c0_6] : memref<8x8xf32, #tpu.memory_space<vmem>>, vector<8x8xf32>
    tpu.vector_store %arg4[%c0_5, %c0_6], %5 {strides = array<i32>} : memref<8x8xf32, #tpu.memory_space<vmem>>, vector<8x8xf32>,
    return
  }
  func.func @transform_0(%arg0: i32) -> (i32, i32) {
    %c0_i32 = arith.constant 0 : i32
    %c0_i32_0 = arith.constant 0 : i32
    return %arg0, %c0_i32 : i32, i32
  }
  func.func @transform_1(%arg0: i32) -> (i32, i32) {
    %c0_i32 = arith.constant 0 : i32
    %c0_i32_0 = arith.constant 0 : i32
    %c0_i32_1 = arith.constant 0 : i32
    return %c0_i32, %c0_i32_0 : i32, i32
  }
  func.func @transform_2(%arg0: i32) -> (i32, i32) {
    %c0_i32 = arith.constant 0 : i32
    %c0_i32_0 = arith.constant 0 : i32
    %c0_i32_1 = arith.constant 0 : i32
    return %c0_i32, %c0_i32_0 : i32, i32
  }
  func.func @transform_3(%arg0: i32) -> (i32, i32) {
    %c0_i32 = arith.constant 0 : i32
    %c0_i32_0 = arith.constant 0 : i32
    return %arg0, %c0_i32 : i32, i32
  }
}

</mosaic_0001>

<llo_original>
// kernel: logistic_regression_forward.2
$region0: #{logistic_regression_forward.2}
  #allocation0 [shape = 'u32[]', space=smem, size = 0x4, offset = 0x4, fixed_abs, tag = 'smem constant byte address 0x4 - core index']
  #allocation1 [shape = 'u32[144,128]{1,0:T(1,128)}', space=vmem, size = 0x12000, scoped, tag = 'internal scratch']
  %s0 = inlined_call_operand.vmem [shape: f32[16,32], index: 0, kind: input, shape index: {}]
  %s1 = inlined_call_operand.vmem [shape: f32[8,32], index: 1, kind: input, shape index: {}]
  %s2 = inlined_call_operand.vmem [shape: f32[8], index: 2, kind: input, shape index: {}]
  %s3 = inlined_call_operand.vmem [shape: f32[16,8], index: 3, kind: output, shape index: {}]
  %s4 = sld [smem:[#allocation0]]
  $region45: #{logistic_regression_forward.2} parent=0
    _
  %s6 = ssub.s32 1, %s4
  %s7 = scalar_select 0, %s6, %s4
  loop: start=0, step=1, limit=4
  $region2: #{logistic_regression_forward.2} parent=0 // loop_pre_header
    _
  $region3: #{logistic_regression_forward.2} parent=0 // loop_header
    %s9 = sphi 0, %s13
    %p10 = scmp.ge.s32.totalorder %s9, 4
    %s19 = sphi 0, %s21
    %s22 = sphi 0, %s19
    %s23 = sphi 0, %s22
    %s39 = sphi 0, %s23
    %s43 = sphi 0, %s43
    %s45 = sphi 0, %s43
    %s46 = sphi 0, %s45
    %s60 = sphi 0, %s46
    %s64 = sphi 0, %s64
    %s66 = sphi 0, %s64
    %s67 = sphi 0, %s66
    %s81 = sphi 0, %s67
    %s87 = sphi 0, %s89
    %s90 = sphi 0, %s87
    %s91 = sphi 0, %s90
    %s107 = sphi 0, %s91
  $region4: #{logistic_regression_forward.2} parent=0 // loop_header_branch
    %12 = sbr.rel (%p10) target = $region8
  $region5: #{logistic_regression_forward.2} parent=0 // loop_body
    %s14 = ssub.s32 %s9, 1
    %s15 = ssub.s32 %s9, 2
    %s16 = sadd.s32 %s9, 1
    %s17 = ssub.s32 %s9, %s16
    %p18 = scmp.eq.s32.totalorder %s17, 0
    %s20 = sadd.s32 %s19, 1
    %s21 = scalar_select %p18, %s19, %s20
    %p24 = pneg %p18
    %p25 = scmp.eq.s32.totalorder %s9, 1
    %p26 = por %p24, %p25
    %p27 = scmp.ne.s32.totalorder %s19, %s22
    %p28 = scmp.eq.s32.totalorder %s9, 0
    %p29 = por %p27, %p28
    %p30 = scmp.ne.s32.totalorder %s19, %s22
    %p31 = scmp.eq.s32.totalorder %s14, 1
    %p32 = por %p30, %p31
    %p33 = scmp.ne.s32.totalorder %s22, %s23
    %p34 = scmp.eq.s32.totalorder %s14, 0
    %p35 = por %p33, %p34
    %p36 = scmp.ne.s32.totalorder %s22, %s23
    %p37 = scmp.eq.s32.totalorder %s15, 1
    %p38 = por %p36, %p37
    %p40 = scmp.ne.s32.totalorder %s23, %s39
    %p41 = scmp.eq.s32.totalorder %s15, 0
    %p42 = por %p40, %p41
    %s44 = sadd.s32 %s43, 1
    %p47 = scmp.eq.s32.totalorder %s9, 1
    %p48 = scmp.ne.s32.totalorder %s43, %s45
    %p49 = scmp.eq.s32.totalorder %s9, 0
    %p50 = por %p48, %p49
    %p51 = scmp.ne.s32.totalorder %s43, %s45
    %p52 = scmp.eq.s32.totalorder %s14, 1
    %p53 = por %p51, %p52
    %p54 = scmp.ne.s32.totalorder %s45, %s46
    %p55 = scmp.eq.s32.totalorder %s14, 0
    %p56 = por %p54, %p55
    %p57 = scmp.ne.s32.totalorder %s45, %s46
    %p58 = scmp.eq.s32.totalorder %s15, 1
    %p59 = por %p57, %p58
    %p61 = scmp.ne.s32.totalorder %s46, %s60
    %p62 = scmp.eq.s32.totalorder %s15, 0
    %p63 = por %p61, %p62
    %s65 = sadd.s32 %s64, 1
    %p68 = scmp.eq.s32.totalorder %s9, 1
    %p69 = scmp.ne.s32.totalorder %s64, %s66
    %p70 = scmp.eq.s32.totalorder %s9, 0
    %p71 = por %p69, %p70
    %p72 = scmp.ne.s32.totalorder %s64, %s66
    %p73 = scmp.eq.s32.totalorder %s14, 1
    %p74 = por %p72, %p73
    %p75 = scmp.ne.s32.totalorder %s66, %s67
    %p76 = scmp.eq.s32.totalorder %s14, 0
    %p77 = por %p75, %p76
    %p78 = scmp.ne.s32.totalorder %s66, %s67
    %p79 = scmp.eq.s32.totalorder %s15, 1
    %p80 = por %p78, %p79
    %p82 = scmp.ne.s32.totalorder %s67, %s81
    %p83 = scmp.eq.s32.totalorder %s15, 0
    %p84 = por %p82, %p83
    %s85 = ssub.s32 %s9, %s16
    %p86 = scmp.eq.s32.totalorder %s85, 0
    %s88 = sadd.s32 %s87, 1
    %s89 = scalar_select %p86, %s87, %s88
    %p92 = pneg %p86
    %p93 = scmp.eq.s32.totalorder %s9, 1
    %p94 = por %p92, %p93
    %p95 = scmp.ne.s32.totalorder %s87, %s90
    %p96 = scmp.eq.s32.totalorder %s9, 0
    %p97 = por %p95, %p96
    %p98 = scmp.ne.s32.totalorder %s87, %s90
    %p99 = scmp.eq.s32.totalorder %s14, 1
    %p100 = por %p98, %p99
    %p101 = scmp.ne.s32.totalorder %s90, %s91
    %p102 = scmp.eq.s32.totalorder %s14, 0
    %p103 = por %p101, %p102
    %p104 = scmp.ne.s32.totalorder %s90, %s91
    %p105 = scmp.eq.s32.totalorder %s15, 1
    %p106 = por %p104, %p105
    %p108 = scmp.ne.s32.totalorder %s91, %s107
    %p109 = scmp.eq.s32.totalorder %s15, 0
    %p110 = por %p108, %p109
    %p111 = scmp.le.s32.totalorder 1, %s9
    %p112 = scmp.lt.s32.totalorder %s9, 3
    %p113 = pnand %p111, %p112
    %p114 = pneg %p113
    // Predicated region
    $region9: #{logistic_regression_forward.2} parent=5 // pred_check
      _
    $region10: #{logistic_regression_forward.2} parent=5 // pred_check_branch
      %116 = sbr.rel (%p113) target = $region12
    $region11: #{logistic_regression_forward.2} parent=5 // pred_region
      %s117 = ssub.s32 %s9, 1
      // Predicated region
      $region13: #{logistic_regression_forward.2} parent=11 // pred_check
        %p118 = pneg %p56
      $region14: #{logistic_regression_forward.2} parent=11 // pred_check_branch
        %120 = sbr.rel (%p118) target = $region16
      $region15: #{logistic_regression_forward.2} parent=11 // pred_region
        _
      $region16: #{logistic_regression_forward.2} parent=11 // pred_fallthru
        _
      // Predicated region
      $region17: #{logistic_regression_forward.2} parent=11 // pred_check
        %p121 = pneg %p77
      $region18: #{logistic_regression_forward.2} parent=11 // pred_check_branch
        %123 = sbr.rel (%p121) target = $region20
      $region19: #{logistic_regression_forward.2} parent=11 // pred_region
        _
      $region20: #{logistic_regression_forward.2} parent=11 // pred_fallthru
        _
    $region12: #{logistic_regression_forward.2} parent=5 // pred_fallthru
      _
    %p124 = scmp.lt.s32.totalorder %s9, 2
    // Predicated region
    $region21: #{logistic_regression_forward.2} parent=5 // pred_check
      %p125 = pneg %p124
    $region22: #{logistic_regression_forward.2} parent=5 // pred_check_branch
      %127 = sbr.rel (%p125) target = $region24
    $region23: #{logistic_regression_forward.2} parent=5 // pred_region
      // Predicated region
      $region25: #{logistic_regression_forward.2} parent=23 // pred_check
        %p128 = pneg %p29
      $region26: #{logistic_regression_forward.2} parent=23 // pred_check_branch
        %130 = sbr.rel (%p128) target = $region28
      $region27: #{logistic_regression_forward.2} parent=23 // pred_region
        %p131 = scmp.lt.s32.totalorder %s9, 1
        %s132 = scalar_select %p131, %s9, 1
        %s133 = smul.addr %s132, 8
        %s134 = scalar_lea.vmem %s0, %s133
      $region28: #{logistic_regression_forward.2} parent=23 // pred_fallthru
        _
    $region24: #{logistic_regression_forward.2} parent=5 // pred_fallthru
      _
    %p135 = scmp.le.s32.totalorder 1, %s9
    %p136 = scmp.lt.s32.totalorder %s9, 3
    %p137 = pnand %p135, %p136
    %p138 = pneg %p137
    // Predicated region
    $region29: #{logistic_regression_forward.2} parent=5 // pred_check
      _
    $region30: #{logistic_regression_forward.2} parent=5 // pred_check_branch
      %140 = sbr.rel (%p137) target = $region32
    $region31: #{logistic_regression_forward.2} parent=5 // pred_region
      #allocation2 [shape = 'u8[16384]{0}', space=vmem, size = 0x4000, dematerialized = true, scoped, tag = 'FusionAdapter Buffer %fusion.1 = f32[32,8]{1,0:T(8,128)} fusion(%param_1.2), kind=kLoop, calls=%fused_computation.1.clone, metadata={op_name="jit(logistic_regression_forward)/transpose" stack_frame_id=7}']
      #allocation3 [shape = 'u8[512]{0}', space=vmem, size = 0x400, dematerialized = true, scoped, tag = 'FusionAdapter Buffer %fusion.2 = f32[1,8]{1,0:T(1,128)} fusion(%param_2.2), kind=kLoop, calls=%fused_computation.2.clone, metadata={op_name="jit(logistic_regression_forward)/reshape" stack_frame_id=8}']
      %s141 = ssub.s32 %s9, 1
      %p142 = scmp.lt.s32.totalorder %s14, 1
      %s143 = scalar_select %p142, %s14, 1
      %s144 = smul.addr %s143, 8
      %s145 = scalar_lea.vmem %s0, %s144
      %p146 = pneg %p35
      %p147 = pneg %p32
      %p148 = pneg %p56
      %p149 = pneg %p53
      %p150 = pneg %p77
      %p151 = pneg %p74
      %p152 = pneg %p103
      %p153 = pneg %p100
      %p154 = scmp.lt.s32.totalorder %s14, 1
      %s155 = scalar_select %p154, %s14, 1
      %s156 = smul.addr %s155, 8
      %s157 = scalar_lea.vmem %s3, %s156
      %p158 = scmp.lt.s32.totalorder %s14, 1
      %s159 = scalar_select %p158, %s14, 1
      %s160 = smul.addr %s159, 8
      %s161 = scalar_lea.vmem %s0, %s160
      %p162 = scmp.lt.s32.totalorder %s14, 1
      %s163 = scalar_select %p162, %s14, 1
      %s164 = smul.addr %s163, 8
      %s165 = scalar_lea.vmem %s3, %s164
      %v166 = vld [vmem:[%s1] sm:$0xff]
      %168 = vst [vmem:[#allocation2] sm:$0xff] %v166
      %s169 = scalar_lea.vmem %s1, 8
      %v170 = vld [vmem:[%s169] sm:$0xff]
      %s171 = scalar_lea.vmem [#allocation2], 8
      %173 = vst [vmem:[%s171] sm:$0xff] %v170
      %s174 = scalar_lea.vmem %s1, 16
      %v175 = vld [vmem:[%s174] sm:$0xff]
      %s176 = scalar_lea.vmem [#allocation2], 16
      %178 = vst [vmem:[%s176] sm:$0xff] %v175
      %s179 = scalar_lea.vmem %s1, 24
      %v180 = vld [vmem:[%s179] sm:$0xff]
      %s181 = scalar_lea.vmem [#allocation2], 24
      %183 = vst [vmem:[%s181] sm:$0xff] %v180
      %v184 = vld [vmem:[%s2] sm:$0x1]
      %186 = vst [vmem:[#allocation3] sm:$0x1] %v184
      %v187 = vld [vmem:[%s161] sm:$0xff]
      %v188 = vld [vmem:[#allocation2] sm:$0xff]
      %v189 = vld [vmem:[#allocation2 + $0x8] sm:$0xff]
      %v190 = vld [vmem:[#allocation2 + $0x10] sm:$0xff]
      %v191 = vld [vmem:[#allocation2 + $0x18] sm:$0xff]
      %v192 = vld [vmem:[#allocation3] sm:$0x1]
      %v194 = vlaneseq
      %v195 = vshrl.u32 %v194, 7
      %v196 = vsub.s32 0, %v195
      %v197 = vrot.slane %v192, %v196
      %vm199 = vcmask 261120
      %v201 = vsel %vm199, %v187, 0
      %203 = vmatprep.subr.mxu0 0.0
      %204 = vmatpush1.msra.mxu0 %v188
      %205 = vmatprep.subr.mxu0 0.0
      %206 = vmatpush1.msra.mxu0 %v189
      %207 = vmatprep.subr.mxu0 0.0
      %208 = vmatpush1.msra.mxu0 %v190
      %209 = vmatprep.subr.mxu0 0.0
      %210 = vmatpush1.msra.mxu0 %v191
      %211 = vmatprep.subr.mxu0 0.0
      %212 = vmatpush1.msra.mxu0 0.0
      %213 = vmatprep.subr.mxu0 0.0
      %214 = vmatpush1.msra.mxu0 0.0
      %215 = vmatprep.subr.mxu0 0.0
      %216 = vmatpush1.msra.mxu0 0.0
      %217 = vmatprep.subr.mxu0 0.0
      %218 = vmatpush1.msra.mxu0 0.0
      %219 = vmatprep.subr.mxu0 0.0
      %220 = vmatpush1.msra.mxu0 0.0
      %221 = vmatprep.subr.mxu0 0.0
      %222 = vmatpush1.msra.mxu0 0.0
      %223 = vmatprep.subr.mxu0 0.0
      %224 = vmatpush1.msra.mxu0 0.0
      %225 = vmatprep.subr.mxu0 0.0
      %226 = vmatpush1.msra.mxu0 0.0
      %227 = vmatprep.subr.mxu0 0.0
      %228 = vmatpush1.msra.mxu0 0.0
      %229 = vmatprep.subr.mxu0 0.0
      %230 = vmatpush1.msra.mxu0 0.0
      %231 = vmatprep.subr.mxu0 0.0
      %232 = vmatpush1.msra.mxu0 0.0
      %233 = vmatprep.subr.mxu0 0.0
      %234 = vmatpush1.msra.mxu0 0.0
      %235 = vmatprep.subr.mxu0 0.0
      %236 = vmatpush1.msra.mxu0 0.0
      %237 = vmatprep.subr.mxu0 0.0
      %238 = vmatpush1.msra.mxu0 0.0
      %239 = vmatprep.subr.mxu0 0.0
      %240 = vmatpush1.msra.mxu0 0.0
      %241 = vmatprep.subr.mxu0 0.0
      %242 = vmatpush1.msra.mxu0 0.0
      %243 = vmatprep.subr.mxu0 0.0
      %244 = vmatpush1.msra.mxu0 0.0
      %245 = vmatprep.subr.mxu0 0.0
      %246 = vmatpush1.msra.mxu0 0.0
      %247 = vmatprep.subr.mxu0 0.0
      %248 = vmatpush1.msra.mxu0 0.0
      %249 = vmatprep.subr.mxu0 0.0
      %250 = vmatpush1.msra.mxu0 0.0
      %251 = vmatprep.subr.mxu0 0.0
      %252 = vmatpush1.msra.mxu0 0.0
      %253 = vmatprep.subr.mxu0 0.0
      %254 = vmatpush1.msra.mxu0 0.0
      %255 = vmatprep.subr.mxu0 0.0
      %256 = vmatpush1.msra.mxu0 0.0
      %257 = vmatprep.subr.mxu0 0.0
      %258 = vmatpush1.msra.mxu0 0.0
      %259 = vmatprep.subr.mxu0 0.0
      %260 = vmatpush1.msra.mxu0 0.0
      %261 = vmatprep.subr.mxu0 0.0
      %262 = vmatpush1.msra.mxu0 0.0
      %263 = vmatprep.subr.mxu0 0.0
      %264 = vmatpush1.msra.mxu0 0.0
      %265 = vmatprep.subr.mxu0 0.0
      %266 = vmatpush1.msra.mxu0 0.0
      %267 = vmatprep.mubr.f32.mxu0 0.0
      %268 = vmatmul.mubr.f32.gmra.mrb[0].mxu0 %v201
      %v269 = vpop.f32.mrb[0].mxu0
      %v270 = vadd.f32 %v197, %v269
      %v271 = vpop.f32.mrb[0].mxu0
      %272 = vdwg.mxu0
      %vm273 = vcmask 64512
      %274 = vst.msk [vmem:[%s165] sm:$0xff] %vm273, %v270
      %p275 = scmp.lt.s32.totalorder %s14, 1
      %s276 = scalar_select %p275, %s14, 1
      %s277 = smul.addr %s276, 8
      %s278 = scalar_lea.vmem %s3, %s277
      // Predicated region
      $region33: #{logistic_regression_forward.2} parent=31 // pred_check
        %p279 = pneg %p100
      $region34: #{logistic_regression_forward.2} parent=31 // pred_check_branch
        %281 = sbr.rel (%p279) target = $region36
      $region35: #{logistic_regression_forward.2} parent=31 // pred_region
        _
      $region36: #{logistic_regression_forward.2} parent=31 // pred_fallthru
        _
    $region32: #{logistic_regression_forward.2} parent=5 // pred_fallthru
      _
    %p282 = scmp.le.s32.totalorder 2, %s9
    // Predicated region
    $region37: #{logistic_regression_forward.2} parent=5 // pred_check
      %p283 = pneg %p282
    $region38: #{logistic_regression_forward.2} parent=5 // pred_check_branch
      %285 = sbr.rel (%p283) target = $region40
    $region39: #{logistic_regression_forward.2} parent=5 // pred_region
      %s286 = ssub.s32 %s9, 2
      // Predicated region
      $region41: #{logistic_regression_forward.2} parent=39 // pred_check
        %p287 = pneg %p106
      $region42: #{logistic_regression_forward.2} parent=39 // pred_check_branch
        %289 = sbr.rel (%p287) target = $region44
      $region43: #{logistic_regression_forward.2} parent=39 // pred_region
        %p290 = scmp.lt.s32.totalorder %s15, 1
        %s291 = scalar_select %p290, %s15, 1
        %s292 = smul.addr %s291, 8
        %s293 = scalar_lea.vmem %s3, %s292
      $region44: #{logistic_regression_forward.2} parent=39 // pred_fallthru
        _
    $region40: #{logistic_regression_forward.2} parent=5 // pred_fallthru
      _
  $region6: #{logistic_regression_forward.2} parent=0 // loop_footer
    %s13 = sadd.s32 1, %s9
  $region7: #{logistic_regression_forward.2} parent=0 // loop_footer_branch
    %8 = sbr.rel target = $region3
  $region8: #{logistic_regression_forward.2} parent=0 // loop_exit
    _

</llo_original>
